<compile_context>
chip_gen: v7x
topology: tpu7x:2x2x1
jax: 0.10.0
libtpu: 0.0.40
codegen_flags: <defaults>
</compile_context>

<pallas_src>
import functools

import jax
import jax.numpy as jnp
from jax.experimental import pallas as pl
from jax.experimental.pallas import tpu as pltpu

NEG_BIG = -9.0e15       # matches torch's -9000000000000000.0 fill value
F32 = jnp.float32


def _round_up(x, m):
    return (x + m - 1) // m * m


# ---------------------------------------------------------------------------
# Stage 1 (row tiled):  Wh = h @ W (emitted bf16),  wh1 = Wh.a1,  wh2 = Wh.a2
# ---------------------------------------------------------------------------
def _proj_kernel(h_ref, w_ref, a1_ref, a2_ref, wh_ref, wh1_ref, wh2_ref):
    wh = jnp.dot(h_ref[...], w_ref[...], preferred_element_type=jnp.float32)
    wh_ref[...] = wh.astype(wh_ref.dtype)            # bf16 key stream for stage 2
    # Width-1 matmuls replaced by multiply + cross-lane reduce (XLU slot).
    # Logits stay f32 -- they feed an exp downstream.
    wh1_ref[...] = jnp.sum(wh * a1_ref[...], axis=1, keepdims=True)
    wh2_ref[...] = jnp.sum(wh * a2_ref[...], axis=1, keepdims=True)


# ---------------------------------------------------------------------------
# Stage 2: masked softmax attention with online (flash-style) softmax.
# Grid = (query blocks [parallel], key blocks [arbitrary]); the output block
# is resident across the key axis and doubles as the accumulator.
# ---------------------------------------------------------------------------
def _attn_kernel(whk_ref, wh1_ref, wh2r_ref, mask_ref, out_ref,
                 m_scr, l_scr, *, alpha, concat):
    ki = pl.program_id(1)

    @pl.when(ki == 0)
    def _init():
        m_scr[...] = jnp.full_like(m_scr, -jnp.inf)
        l_scr[...] = jnp.zeros_like(l_scr)
        out_ref[...] = jnp.zeros_like(out_ref)        # out_ref is the accumulator

    m8 = mask_ref[...]                                # int8: 1 keep, 0 masked, -1 padded
    e = wh1_ref[...] + wh2r_ref[...]                  # (tq,1) + (1,tk) -> (tq,tk)
    e = jnp.where(e > 0, e, alpha * e)                # LeakyReLU
    s = jnp.where(m8 > 0, e, jnp.float32(NEG_BIG))

    # Online softmax update.
    m_prev = m_scr[...]
    m_new = jnp.maximum(m_prev, jnp.max(s, axis=1, keepdims=True))
    corr = jnp.exp(m_prev - m_new)
    p = jnp.exp(s - m_new)
    p = jnp.where(m8 < 0, 0.0, p)                     # padded keys contribute exactly 0

    l_scr[...] = corr * l_scr[...] + jnp.sum(p, axis=1, keepdims=True)
    out_ref[...] = corr * out_ref[...] + jnp.dot(
        p.astype(whk_ref.dtype), whk_ref[...],        # bf16 x bf16 on the MXU
        preferred_element_type=jnp.float32)
    m_scr[...] = m_new

    @pl.when(ki == pl.num_programs(1) - 1)
    def _finalize():
        # Deferred normalization: N*D multiplies instead of N*N divides.
        inv = pl.reciprocal(l_scr[...], approx=False)
        o = out_ref[...] * inv
        if concat:
            o = jnp.where(o > 0, o, jnp.exp(o) - 1.0)  # ELU(alpha=1)
        out_ref[...] = o


# ---------------------------------------------------------------------------
# Wrapper
# ---------------------------------------------------------------------------
def gdra_forward(h, W, a, mask, lamda, *, alpha, concat=True,
                 block_q=256, block_k=512):
    n, in_f = h.shape
    d = W.shape[1]

    # --- tile selection -------------------------------------------------------
    n_128 = _round_up(n, 128)
    block_k = min(block_k, n_128)
    block_q = min(block_q, block_k)
    assert block_q % 128 == 0 and block_k % 128 == 0 and block_k % block_q == 0
    n_pad = _round_up(n, block_k)                      # divisible by both blocks
    nq, nk = n_pad // block_q, n_pad // block_k

    # --- layout plumbing (done once, outside the hot loop) --------------------
    h_p = jnp.pad(h.astype(F32), ((0, n_pad - n), (0, 0)))
    w_f = W.astype(F32)
    a1 = a[:d, 0].astype(F32).reshape(1, d)
    a2 = a[d:, 0].astype(F32).reshape(1, d)

    # dischange == zeros() in the torch forward, so its two mask rewrites reduce
    # to:  lamda < 0 -> mask := 0 everywhere;  lamda >= 0 -> mask unchanged.
    lam_ok = jnp.asarray(lamda, dtype=F32) >= 0.0
    keep = jnp.logical_and(mask > 0, lam_ok).astype(jnp.int8)          # 1 / 0
    # Tri-state int8 mask: 1 attend, 0 masked (NEG_BIG logit), -1 zero-padding.
    mask_i8 = jnp.pad(keep, ((0, n_pad - n), (0, n_pad - n)), constant_values=-1)

    # ---- stage 1: Wh (bf16), wh1, wh2 -----------------------------------------
    wh, wh1, wh2 = pl.pallas_call(
        _proj_kernel,
        out_shape=(jax.ShapeDtypeStruct((n_pad, d), jnp.bfloat16),
                   jax.ShapeDtypeStruct((n_pad, 1), F32),
                   jax.ShapeDtypeStruct((n_pad, 1), F32)),
        grid=(n_pad // block_q,),
        in_specs=[
            pl.BlockSpec((block_q, in_f), lambda i: (i, 0)),   # h row block
            pl.BlockSpec((in_f, d), lambda i: (0, 0)),         # W (full)
            pl.BlockSpec((1, d), lambda i: (0, 0)),            # a1 row
            pl.BlockSpec((1, d), lambda i: (0, 0)),            # a2 row
        ],
        out_specs=(
            pl.BlockSpec((block_q, d), lambda i: (i, 0)),
            pl.BlockSpec((block_q, 1), lambda i: (i, 0)),
            pl.BlockSpec((block_q, 1), lambda i: (i, 0)),
        ),
        compiler_params=pltpu.CompilerParams(
            dimension_semantics=("parallel",),
            vmem_limit_bytes=32 * 1024 * 1024),
    )(h_p, w_f, a1, a2)

    # (N,1) -> (1,N): small one-off O(N) relayout in XLA (not in the hot loop).
    wh2_row = wh2.reshape(1, n_pad)

    # ---- stage 2: masked flash attention --------------------------------------
    kernel = functools.partial(_attn_kernel, alpha=float(alpha), concat=concat)

    cost = pl.CostEstimate(
        flops=2 * n_pad * n_pad * d + 8 * n_pad * n_pad,
        transcendentals=n_pad * n_pad,
        bytes_accessed=n_pad * n_pad                   # int8 mask stream
        + nq * n_pad * d * 2                           # bf16 Wh key re-stream
        + n_pad * d * 4                                # f32 output
        + 3 * n_pad * 4,                               # wh1 / wh2 logit vectors
    )

    out = pl.pallas_call(
        kernel,
        out_shape=jax.ShapeDtypeStruct((n_pad, d), F32),
        grid=(nq, nk),
        in_specs=[
            pl.BlockSpec((block_k, d), lambda qi, ki: (ki, 0)),        # Wh keys (bf16)
            pl.BlockSpec((block_q, 1), lambda qi, ki: (qi, 0)),        # wh1 (query col)
            pl.BlockSpec((1, block_k), lambda qi, ki: (0, ki)),        # wh2^T (key row)
            pl.BlockSpec((block_q, block_k), lambda qi, ki: (qi, ki)), # tri-state mask
        ],
        out_specs=pl.BlockSpec((block_q, d), lambda qi, ki: (qi, 0)),
        scratch_shapes=[
            pltpu.VMEM((block_q, 1), F32),     # running max
            pltpu.VMEM((block_q, 1), F32),     # running sum
        ],
        compiler_params=pltpu.CompilerParams(
            dimension_semantics=("parallel", "arbitrary"),
            vmem_limit_bytes=32 * 1024 * 1024),
        cost_estimate=cost,
    )(wh, wh1, wh2_row, mask_i8)

    return out[:n, :]


# ---------------------------------------------------------------------------
# Pure-JAX reference mirroring the PyTorch forward (for validation).
# ---------------------------------------------------------------------------
def gdra_reference(h, W, a, mask, lamda, *, alpha, concat=True):
    hi = jax.lax.Precision.HIGHEST
    d = W.shape[1]
    wh = jnp.dot(h, W, precision=hi)
    e = jnp.dot(wh, a[:d, :], precision=hi) + jnp.dot(wh, a[d:, :], precision=hi).T
    e = jnp.where(e > 0, e, alpha * e)
    neg = jnp.full_like(e, NEG_BIG)
    dis = jnp.zeros_like(e)
    m = jnp.where(dis > lamda, jnp.ones_like(mask), mask)
    m = jnp.where(dis < -lamda, jnp.zeros_like(mask), m)
    att = jax.nn.softmax(jnp.where(m > 0, e, neg), axis=1)
    out = jnp.dot(att, wh, precision=hi)
    return jax.nn.elu(out) if concat else out


def xavier_uniform(key, shape, gain):
    fan_in, fan_out = shape[0], shape[1]
    bound = gain * jnp.sqrt(6.0 / (fan_in + fan_out))
    return jax.random.uniform(key, shape, jnp.float32, -bound, bound)


if __name__ == "__main__":
    # 600-node graph, in/out features = 16.  With the default tiles this pads
    # to N=1024 and runs a 4x2 grid of (256 x 512) tiles, exercising multiple
    # query/key blocks, padded-key exclusion and the bf16 accumulation path.
    N, IN_F, OUT_F = 600, 16, 16
    alpha, lamda = 0.2, 0.5

    key = jax.random.PRNGKey(0)
    k_h, k_w, k_a, k_m = jax.random.split(key, 4)

    h = jax.random.normal(k_h, (N, IN_F), jnp.float32)
    W = xavier_uniform(k_w, (IN_F, OUT_F), gain=1.414)
    a = xavier_uniform(k_a, (2 * OUT_F, 1), gain=1.414)
    mask = jax.random.bernoulli(k_m, 0.5, (N, N)).astype(jnp.float32)

    out = gdra_forward(h, W, a, mask, lamda, alpha=alpha, concat=True)
    out = jax.block_until_ready(out)

    ref = gdra_reference(h, W, a, mask, lamda, alpha=alpha, concat=True)
    assert out.shape == (N, OUT_F)
    err = float(jnp.max(jnp.abs(out - ref)))
    # bf16 p / Wh in the accumulation matmul (f32 accumulate) -> ~1e-2 tolerance.
    assert jnp.allclose(out, ref, rtol=3e-2, atol=3e-2), err

    print("KERNEL_OK")
</pallas_src>

<mosaic_0001>
module attributes {stable_mosaic.version = 11 : i64} {
  func.func @_proj_kernel(%arg0: i32, %arg1: memref<256x16xf32, #tpu.memory_space<vmem>>, %arg2: memref<16x16xf32, #tpu.memory_space<vmem>>, %arg3: memref<1x16xf32, #tpu.memory_space<vmem>>, %arg4: memref<1x16xf32, #tpu.memory_space<vmem>>, %arg5: memref<256x16xbf16, #tpu.memory_space<vmem>>, %arg6: memref<256x1xf32, #tpu.memory_space<vmem>>, %arg7: memref<256x1xf32, #tpu.memory_space<vmem>>) attributes {dimension_semantics = [#tpu.dimension_semantics<parallel>], iteration_bounds = array<i64: 4>, scalar_prefetch = 0 : i64, scratch_operands = 0 : i64, tpu.core_type = #tpu.core_type<tc>, window_params = [{transform_indices = @transform_0, window_bounds = array<i64: 256, 16>}, {pipeline_mode = #tpu.pipeline_mode<synchronous>, transform_indices = @transform_1, window_bounds = array<i64: 16, 16>}, {pipeline_mode = #tpu.pipeline_mode<synchronous>, transform_indices = @transform_2, window_bounds = array<i64: 1, 16>}, {pipeline_mode = #tpu.pipeline_mode<synchronous>, transform_indices = @transform_3, window_bounds = array<i64: 1, 16>}, {transform_indices = @transform_4, window_bounds = array<i64: 256, 16>}, {transform_indices = @transform_5, window_bounds = array<i64: 256, 1>}, {transform_indices = @transform_6, window_bounds = array<i64: 256, 1>}]} {
    %c0 = arith.constant 0 : index
    %c0_0 = arith.constant 0 : index
    %0 = vector.load %arg1[%c0, %c0_0] : memref<256x16xf32, #tpu.memory_space<vmem>>, vector<256x16xf32>
    %c0_1 = arith.constant 0 : index
    %c0_2 = arith.constant 0 : index
    %1 = vector.load %arg2[%c0_1, %c0_2] : memref<16x16xf32, #tpu.memory_space<vmem>>, vector<16x16xf32>
    %cst = arith.constant dense<0.000000e+00> : vector<256x16xf32>
    %2 = tpu.matmul %0, %1, %cst {dimension_numbers = #tpu.dot_dimension_numbers<[1], [0], [0], [1], [0, 0, 1, 1], [], []>} : vector<256x16xf32>, vector<16x16xf32>, vector<256x16xf32> -> vector<256x16xf32>
    %3 = arith.truncf %2 : vector<256x16xf32> to vector<256x16xbf16>
    %c0_3 = arith.constant 0 : index
    %c0_4 = arith.constant 0 : index
    %4 = vector.load %arg5[%c0_3, %c0_4] : memref<256x16xbf16, #tpu.memory_space<vmem>>, vector<256x16xbf16>
    tpu.vector_store %arg5[%c0_3, %c0_4], %3 {strides = array<i32>} : memref<256x16xbf16, #tpu.memory_space<vmem>>, vector<256x16xbf16>,
    %c0_5 = arith.constant 0 : index
    %c0_6 = arith.constant 0 : index
    %5 = vector.load %arg3[%c0_5, %c0_6] : memref<1x16xf32, #tpu.memory_space<vmem>>, vector<1x16xf32>
    %6 = vector.broadcast %5 : vector<1x16xf32> to vector<256x16xf32>
    %7 = arith.mulf %2, %6 : vector<256x16xf32>
    %cst_7 = arith.constant dense<0.000000e+00> : vector<256xf32>
    %8 = vector.multi_reduction <add>, %7, %cst_7 [1] : vector<256x16xf32> to vector<256xf32>
    %9 = vector.shape_cast %8 : vector<256xf32> to vector<256x1xf32>
    %c0_8 = arith.constant 0 : index
    %c0_9 = arith.constant 0 : index
    %10 = vector.load %arg6[%c0_8, %c0_9] : memref<256x1xf32, #tpu.memory_space<vmem>>, vector<256x1xf32>
    tpu.vector_store %arg6[%c0_8, %c0_9], %9 {strides = array<i32>} : memref<256x1xf32, #tpu.memory_space<vmem>>, vector<256x1xf32>,
    %c0_10 = arith.constant 0 : index
    %c0_11 = arith.constant 0 : index
    %11 = vector.load %arg4[%c0_10, %c0_11] : memref<1x16xf32, #tpu.memory_space<vmem>>, vector<1x16xf32>
    %12 = vector.broadcast %11 : vector<1x16xf32> to vector<256x16xf32>
    %13 = arith.mulf %2, %12 : vector<256x16xf32>
    %cst_12 = arith.constant dense<0.000000e+00> : vector<256xf32>
    %14 = vector.multi_reduction <add>, %13, %cst_12 [1] : vector<256x16xf32> to vector<256xf32>
    %15 = vector.shape_cast %14 : vector<256xf32> to vector<256x1xf32>
    %c0_13 = arith.constant 0 : index
    %c0_14 = arith.constant 0 : index
    %16 = vector.load %arg7[%c0_13, %c0_14] : memref<256x1xf32, #tpu.memory_space<vmem>>, vector<256x1xf32>
    tpu.vector_store %arg7[%c0_13, %c0_14], %15 {strides = array<i32>} : memref<256x1xf32, #tpu.memory_space<vmem>>, vector<256x1xf32>,
    return
  }
  func.func @transform_0(%arg0: i32) -> (i32, i32) {
    %c0_i32 = arith.constant 0 : i32
    %c0_i32_0 = arith.constant 0 : i32
    return %arg0, %c0_i32 : i32, i32
  }
  func.func @transform_1(%arg0: i32) -> (i32, i32) {
    %c0_i32 = arith.constant 0 : i32
    %c0_i32_0 = arith.constant 0 : i32
    %c0_i32_1 = arith.constant 0 : i32
    return %c0_i32, %c0_i32_0 : i32, i32
  }
  func.func @transform_2(%arg0: i32) -> (i32, i32) {
    %c0_i32 = arith.constant 0 : i32
    %c0_i32_0 = arith.constant 0 : i32
    %c0_i32_1 = arith.constant 0 : i32
    return %c0_i32, %c0_i32_0 : i32, i32
  }
  func.func @transform_3(%arg0: i32) -> (i32, i32) {
    %c0_i32 = arith.constant 0 : i32
    %c0_i32_0 = arith.constant 0 : i32
    %c0_i32_1 = arith.constant 0 : i32
    return %c0_i32, %c0_i32_0 : i32, i32
  }
  func.func @transform_4(%arg0: i32) -> (i32, i32) {
    %c0_i32 = arith.constant 0 : i32
    %c0_i32_0 = arith.constant 0 : i32
    return %arg0, %c0_i32 : i32, i32
  }
  func.func @transform_5(%arg0: i32) -> (i32, i32) {
    %c0_i32 = arith.constant 0 : i32
    %c0_i32_0 = arith.constant 0 : i32
    return %arg0, %c0_i32 : i32, i32
  }
  func.func @transform_6(%arg0: i32) -> (i32, i32) {
    %c0_i32 = arith.constant 0 : i32
    %c0_i32_0 = arith.constant 0 : i32
    return %arg0, %c0_i32 : i32, i32
  }
}

</mosaic_0001>

<llo_original>
// kernel: tpu_custom_call.1
$region0: #{tpu_custom_call.1}
  #allocation0 [shape = 'u32[]', space=smem, size = 0x4, offset = 0x4, fixed_abs, tag = 'smem constant byte address 0x4 - core index']
  #allocation1 [shape = 'u32[144,128]{1,0:T(1,128)}', space=vmem, size = 0x12000, scoped, tag = 'internal scratch']
  %s0 = inlined_call_operand.vmem [shape: f32[1024,16], index: 0, kind: input, shape index: {}]
  %s1 = inlined_call_operand.vmem [shape: f32[16,16], index: 1, kind: input, shape index: {}]
  %s2 = inlined_call_operand.vmem [shape: f32[1,16], index: 2, kind: input, shape index: {}]
  %s3 = inlined_call_operand.vmem [shape: f32[1,16], index: 3, kind: input, shape index: {}]
  %s4 = inlined_call_operand.vmem [shape: bf16[1024,16], index: 4, kind: output, shape index: {0}]
  %s5 = inlined_call_operand.vmem [shape: f32[1024,1], index: 5, kind: output, shape index: {1}]
  %s6 = inlined_call_operand.vmem [shape: f32[1024,1], index: 6, kind: output, shape index: {2}]
  %7 = xla_tuple %s4, %s5, %s6
  %s8 = sld [smem:[#allocation0]]
  $region65: #{tpu_custom_call.1} parent=0
    _
  %s10 = ssub.s32 1, %s8
  %s11 = scalar_select 0, %s10, %s8
  loop: start=0, step=1, limit=6
  $region2: #{tpu_custom_call.1} parent=0 // loop_pre_header
    _
  $region3: #{tpu_custom_call.1} parent=0 // loop_header
    %s13 = sphi 0, %s17
    %p14 = scmp.ge.s32.totalorder %s13, 6
    %s23 = sphi 0, %s25
    %s26 = sphi 0, %s23
    %s27 = sphi 0, %s26
    %s43 = sphi 0, %s27
    %s47 = sphi 0, %s47
    %s49 = sphi 0, %s47
    %s50 = sphi 0, %s49
    %s64 = sphi 0, %s50
    %s68 = sphi 0, %s68
    %s70 = sphi 0, %s68
    %s71 = sphi 0, %s70
    %s85 = sphi 0, %s71
    %s89 = sphi 0, %s89
    %s91 = sphi 0, %s89
    %s92 = sphi 0, %s91
    %s106 = sphi 0, %s92
    %s112 = sphi 0, %s114
    %s115 = sphi 0, %s112
    %s116 = sphi 0, %s115
    %s132 = sphi 0, %s116
    %s138 = sphi 0, %s140
    %s141 = sphi 0, %s138
    %s142 = sphi 0, %s141
    %s158 = sphi 0, %s142
    %s164 = sphi 0, %s166
    %s167 = sphi 0, %s164
    %s168 = sphi 0, %s167
    %s184 = sphi 0, %s168
  $region4: #{tpu_custom_call.1} parent=0 // loop_header_branch
    %16 = sbr.rel (%p14) target = $region8
  $region5: #{tpu_custom_call.1} parent=0 // loop_body
    %s18 = ssub.s32 %s13, 1
    %s19 = ssub.s32 %s13, 2
    %s20 = sadd.s32 %s13, 1
    %s21 = ssub.s32 %s13, %s20
    %p22 = scmp.eq.s32.totalorder %s21, 0
    %s24 = sadd.s32 %s23, 1
    %s25 = scalar_select %p22, %s23, %s24
    %p28 = pneg %p22
    %p29 = scmp.eq.s32.totalorder %s13, 3
    %p30 = por %p28, %p29
    %p31 = scmp.ne.s32.totalorder %s23, %s26
    %p32 = scmp.eq.s32.totalorder %s13, 0
    %p33 = por %p31, %p32
    %p34 = scmp.ne.s32.totalorder %s23, %s26
    %p35 = scmp.eq.s32.totalorder %s18, 3
    %p36 = por %p34, %p35
    %p37 = scmp.ne.s32.totalorder %s26, %s27
    %p38 = scmp.eq.s32.totalorder %s18, 0
    %p39 = por %p37, %p38
    %p40 = scmp.ne.s32.totalorder %s26, %s27
    %p41 = scmp.eq.s32.totalorder %s19, 3
    %p42 = por %p40, %p41
    %p44 = scmp.ne.s32.totalorder %s27, %s43
    %p45 = scmp.eq.s32.totalorder %s19, 0
    %p46 = por %p44, %p45
    %s48 = sadd.s32 %s47, 1
    %p51 = scmp.eq.s32.totalorder %s13, 3
    %p52 = scmp.ne.s32.totalorder %s47, %s49
    %p53 = scmp.eq.s32.totalorder %s13, 0
    %p54 = por %p52, %p53
    %p55 = scmp.ne.s32.totalorder %s47, %s49
    %p56 = scmp.eq.s32.totalorder %s18, 3
    %p57 = por %p55, %p56
    %p58 = scmp.ne.s32.totalorder %s49, %s50
    %p59 = scmp.eq.s32.totalorder %s18, 0
    %p60 = por %p58, %p59
    %p61 = scmp.ne.s32.totalorder %s49, %s50
    %p62 = scmp.eq.s32.totalorder %s19, 3
    %p63 = por %p61, %p62
    %p65 = scmp.ne.s32.totalorder %s50, %s64
    %p66 = scmp.eq.s32.totalorder %s19, 0
    %p67 = por %p65, %p66
    %s69 = sadd.s32 %s68, 1
    %p72 = scmp.eq.s32.totalorder %s13, 3
    %p73 = scmp.ne.s32.totalorder %s68, %s70
    %p74 = scmp.eq.s32.totalorder %s13, 0
    %p75 = por %p73, %p74
    %p76 = scmp.ne.s32.totalorder %s68, %s70
    %p77 = scmp.eq.s32.totalorder %s18, 3
    %p78 = por %p76, %p77
    %p79 = scmp.ne.s32.totalorder %s70, %s71
    %p80 = scmp.eq.s32.totalorder %s18, 0
    %p81 = por %p79, %p80
    %p82 = scmp.ne.s32.totalorder %s70, %s71
    %p83 = scmp.eq.s32.totalorder %s19, 3
    %p84 = por %p82, %p83
    %p86 = scmp.ne.s32.totalorder %s71, %s85
    %p87 = scmp.eq.s32.totalorder %s19, 0
    %p88 = por %p86, %p87
    %s90 = sadd.s32 %s89, 1
    %p93 = scmp.eq.s32.totalorder %s13, 3
    %p94 = scmp.ne.s32.totalorder %s89, %s91
    %p95 = scmp.eq.s32.totalorder %s13, 0
    %p96 = por %p94, %p95
    %p97 = scmp.ne.s32.totalorder %s89, %s91
    %p98 = scmp.eq.s32.totalorder %s18, 3
    %p99 = por %p97, %p98
    %p100 = scmp.ne.s32.totalorder %s91, %s92
    %p101 = scmp.eq.s32.totalorder %s18, 0
    %p102 = por %p100, %p101
    %p103 = scmp.ne.s32.totalorder %s91, %s92
    %p104 = scmp.eq.s32.totalorder %s19, 3
    %p105 = por %p103, %p104
    %p107 = scmp.ne.s32.totalorder %s92, %s106
    %p108 = scmp.eq.s32.totalorder %s19, 0
    %p109 = por %p107, %p108
    %s110 = ssub.s32 %s13, %s20
    %p111 = scmp.eq.s32.totalorder %s110, 0
    %s113 = sadd.s32 %s112, 1
    %s114 = scalar_select %p111, %s112, %s113
    %p117 = pneg %p111
    %p118 = scmp.eq.s32.totalorder %s13, 3
    %p119 = por %p117, %p118
    %p120 = scmp.ne.s32.totalorder %s112, %s115
    %p121 = scmp.eq.s32.totalorder %s13, 0
    %p122 = por %p120, %p121
    %p123 = scmp.ne.s32.totalorder %s112, %s115
    %p124 = scmp.eq.s32.totalorder %s18, 3
    %p125 = por %p123, %p124
    %p126 = scmp.ne.s32.totalorder %s115, %s116
    %p127 = scmp.eq.s32.totalorder %s18, 0
    %p128 = por %p126, %p127
    %p129 = scmp.ne.s32.totalorder %s115, %s116
    %p130 = scmp.eq.s32.totalorder %s19, 3
    %p131 = por %p129, %p130
    %p133 = scmp.ne.s32.totalorder %s116, %s132
    %p134 = scmp.eq.s32.totalorder %s19, 0
    %p135 = por %p133, %p134
    %s136 = ssub.s32 %s13, %s20
    %p137 = scmp.eq.s32.totalorder %s136, 0
    %s139 = sadd.s32 %s138, 1
    %s140 = scalar_select %p137, %s138, %s139
    %p143 = pneg %p137
    %p144 = scmp.eq.s32.totalorder %s13, 3
    %p145 = por %p143, %p144
    %p146 = scmp.ne.s32.totalorder %s138, %s141
    %p147 = scmp.eq.s32.totalorder %s13, 0
    %p148 = por %p146, %p147
    %p149 = scmp.ne.s32.totalorder %s138, %s141
    %p150 = scmp.eq.s32.totalorder %s18, 3
    %p151 = por %p149, %p150
    %p152 = scmp.ne.s32.totalorder %s141, %s142
    %p153 = scmp.eq.s32.totalorder %s18, 0
    %p154 = por %p152, %p153
    %p155 = scmp.ne.s32.totalorder %s141, %s142
    %p156 = scmp.eq.s32.totalorder %s19, 3
    %p157 = por %p155, %p156
    %p159 = scmp.ne.s32.totalorder %s142, %s158
    %p160 = scmp.eq.s32.totalorder %s19, 0
    %p161 = por %p159, %p160
    %s162 = ssub.s32 %s13, %s20
    %p163 = scmp.eq.s32.totalorder %s162, 0
    %s165 = sadd.s32 %s164, 1
    %s166 = scalar_select %p163, %s164, %s165
    %p169 = pneg %p163
    %p170 = scmp.eq.s32.totalorder %s13, 3
    %p171 = por %p169, %p170
    %p172 = scmp.ne.s32.totalorder %s164, %s167
    %p173 = scmp.eq.s32.totalorder %s13, 0
    %p174 = por %p172, %p173
    %p175 = scmp.ne.s32.totalorder %s164, %s167
    %p176 = scmp.eq.s32.totalorder %s18, 3
    %p177 = por %p175, %p176
    %p178 = scmp.ne.s32.totalorder %s167, %s168
    %p179 = scmp.eq.s32.totalorder %s18, 0
    %p180 = por %p178, %p179
    %p181 = scmp.ne.s32.totalorder %s167, %s168
    %p182 = scmp.eq.s32.totalorder %s19, 3
    %p183 = por %p181, %p182
    %p185 = scmp.ne.s32.totalorder %s168, %s184
    %p186 = scmp.eq.s32.totalorder %s19, 0
    %p187 = por %p185, %p186
    %p188 = scmp.le.s32.totalorder 1, %s13
    %p189 = scmp.lt.s32.totalorder %s13, 5
    %p190 = pnand %p188, %p189
    %p191 = pneg %p190
    // Predicated region
    $region9: #{tpu_custom_call.1} parent=5 // pred_check
      _
    $region10: #{tpu_custom_call.1} parent=5 // pred_check_branch
      %193 = sbr.rel (%p190) target = $region12
    $region11: #{tpu_custom_call.1} parent=5 // pred_region
      %s194 = ssub.s32 %s13, 1
      // Predicated region
      $region13: #{tpu_custom_call.1} parent=11 // pred_check
        %p195 = pneg %p60
      $region14: #{tpu_custom_call.1} parent=11 // pred_check_branch
        %197 = sbr.rel (%p195) target = $region16
      $region15: #{tpu_custom_call.1} parent=11 // pred_region
        _
      $region16: #{tpu_custom_call.1} parent=11 // pred_fallthru
        _
      // Predicated region
      $region17: #{tpu_custom_call.1} parent=11 // pred_check
        %p198 = pneg %p81
      $region18: #{tpu_custom_call.1} parent=11 // pred_check_branch
        %200 = sbr.rel (%p198) target = $region20
      $region19: #{tpu_custom_call.1} parent=11 // pred_region
        _
      $region20: #{tpu_custom_call.1} parent=11 // pred_fallthru
        _
      // Predicated region
      $region21: #{tpu_custom_call.1} parent=11 // pred_check
        %p201 = pneg %p102
      $region22: #{tpu_custom_call.1} parent=11 // pred_check_branch
        %203 = sbr.rel (%p201) target = $region24
      $region23: #{tpu_custom_call.1} parent=11 // pred_region
        _
      $region24: #{tpu_custom_call.1} parent=11 // pred_fallthru
        _
    $region12: #{tpu_custom_call.1} parent=5 // pred_fallthru
      _
    %p204 = scmp.lt.s32.totalorder %s13, 4
    // Predicated region
    $region25: #{tpu_custom_call.1} parent=5 // pred_check
      %p205 = pneg %p204
    $region26: #{tpu_custom_call.1} parent=5 // pred_check_branch
      %207 = sbr.rel (%p205) target = $region28
    $region27: #{tpu_custom_call.1} parent=5 // pred_region
      // Predicated region
      $region29: #{tpu_custom_call.1} parent=27 // pred_check
        %p208 = pneg %p33
      $region30: #{tpu_custom_call.1} parent=27 // pred_check_branch
        %210 = sbr.rel (%p208) target = $region32
      $region31: #{tpu_custom_call.1} parent=27 // pred_region
        %s211 = smul.u32 32, %s13
        %p212 = scmp.lt.s32.totalorder %s211, 127
        %s213 = scalar_select %p212, %s211, 127
        %s214 = smul.addr %s213, 8
        %s215 = scalar_lea.vmem %s0, %s214
        %s216 = smul.u32 32, %s13
      $region32: #{tpu_custom_call.1} parent=27 // pred_fallthru
        _
    $region28: #{tpu_custom_call.1} parent=5 // pred_fallthru
      _
    %p217 = scmp.le.s32.totalorder 1, %s13
    %p218 = scmp.lt.s32.totalorder %s13, 5
    %p219 = pnand %p217, %p218
    %p220 = pneg %p219
    // Predicated region
    $region33: #{tpu_custom_call.1} parent=5 // pred_check
      _
    $region34: #{tpu_custom_call.1} parent=5 // pred_check_branch
      %222 = sbr.rel (%p219) target = $region36
    $region35: #{tpu_custom_call.1} parent=5 // pred_region
      %s223 = ssub.s32 %s13, 1
      %s224 = smul.u32 32, %s18
      %p225 = scmp.lt.s32.totalorder %s224, 127
      %s226 = scalar_select %p225, %s224, 127
      %s227 = smul.addr %s226, 8
      %s228 = scalar_lea.vmem %s0, %s227
      %p229 = pneg %p39
      %p230 = pneg %p36
      %p231 = pneg %p60
      %p232 = pneg %p57
      %p233 = pneg %p81
      %p234 = pneg %p78
      %p235 = pneg %p102
      %p236 = pneg %p99
      %p237 = pneg %p128
      %p238 = pneg %p125
      %s239 = smul.u32 32, %s18
      %p240 = scmp.lt.s32.totalorder %s239, 127
      %s241 = scalar_select %p240, %s239, 127
      %s242 = smul.addr %s241, 4
      %s243 = scalar_lea.vmem %s4, %s242
      %p244 = pneg %p154
      %p245 = pneg %p151
      %s246 = smul.u32 32, %s18
      %p247 = scmp.lt.s32.totalorder %s246, 127
      %s248 = scalar_select %p247, %s246, 127
      %s249 = smul.addr %s248, 8
      %s250 = scalar_lea.vmem %s5, %s249
      %p251 = pneg %p180
      %p252 = pneg %p177
      %s253 = smul.u32 32, %s18
      %p254 = scmp.lt.s32.totalorder %s253, 127
      %s255 = scalar_select %p254, %s253, 127
      %s256 = smul.addr %s255, 8
      %s257 = scalar_lea.vmem %s6, %s256
      %s258 = smul.u32 32, %s18
      %p259 = scmp.lt.s32.totalorder %s258, 127
      %s260 = scalar_select %p259, %s258, 127
      %s261 = smul.addr %s260, 8
      %s262 = scalar_lea.vmem %s0, %s261
      %s263 = smul.u32 32, %s18
      %s264 = smul.u32 32, %s18
      %p265 = scmp.lt.s32.totalorder %s264, 127
      %s266 = scalar_select %p265, %s264, 127
      %s267 = smul.addr %s266, 4
      %s268 = scalar_lea.vmem %s4, %s267
      %s269 = smul.u32 32, %s18
      %s270 = smul.u32 32, %s18
      %p271 = scmp.lt.s32.totalorder %s270, 127
      %s272 = scalar_select %p271, %s270, 127
      %s273 = smul.addr %s272, 8
      %s274 = scalar_lea.vmem %s5, %s273
      %s275 = smul.u32 32, %s18
      %s276 = smul.u32 32, %s18
      %p277 = scmp.lt.s32.totalorder %s276, 127
      %s278 = scalar_select %p277, %s276, 127
      %s279 = smul.addr %s278, 8
      %s280 = scalar_lea.vmem %s6, %s279
      %s281 = smul.u32 32, %s18
      %v282 = vld [vmem:[%s262] sm:$0xff]
      %v283 = vld [vmem:[%s262 + $0x8] sm:$0xff]
      %v284 = vld [vmem:[%s262 + $0x10] sm:$0xff]
      %v285 = vld [vmem:[%s262 + $0x18] sm:$0xff]
      %v286 = vld [vmem:[%s262 + $0x20] sm:$0xff]
      %v287 = vld [vmem:[%s262 + $0x28] sm:$0xff]
      %v288 = vld [vmem:[%s262 + $0x30] sm:$0xff]
      %v289 = vld [vmem:[%s262 + $0x38] sm:$0xff]
      %v290 = vld [vmem:[%s262 + $0x40] sm:$0xff]
      %v291 = vld [vmem:[%s262 + $0x48] sm:$0xff]
      %v292 = vld [vmem:[%s262 + $0x50] sm:$0xff]
      %v293 = vld [vmem:[%s262 + $0x58] sm:$0xff]
      %v294 = vld [vmem:[%s262 + $0x60] sm:$0xff]
      %v295 = vld [vmem:[%s262 + $0x68] sm:$0xff]
      %v296 = vld [vmem:[%s262 + $0x70] sm:$0xff]
      %v297 = vld [vmem:[%s262 + $0x78] sm:$0xff]
      %v298 = vld [vmem:[%s262 + $0x80] sm:$0xff]
      %v299 = vld [vmem:[%s262 + $0x88] sm:$0xff]
      %v300 = vld [vmem:[%s262 + $0x90] sm:$0xff]
      %v301 = vld [vmem:[%s262 + $0x98] sm:$0xff]
      %v302 = vld [vmem:[%s262 + $0xa0] sm:$0xff]
      %v303 = vld [vmem:[%s262 + $0xa8] sm:$0xff]
      %v304 = vld [vmem:[%s262 + $0xb0] sm:$0xff]
      %v305 = vld [vmem:[%s262 + $0xb8] sm:$0xff]
      %v306 = vld [vmem:[%s262 + $0xc0] sm:$0xff]
      %v307 = vld [vmem:[%s262 + $0xc8] sm:$0xff]
      %v308 = vld [vmem:[%s262 + $0xd0] sm:$0xff]
      %v309 = vld [vmem:[%s262 + $0xd8] sm:$0xff]
      %v310 = vld [vmem:[%s262 + $0xe0] sm:$0xff]
      %v311 = vld [vmem:[%s262 + $0xe8] sm:$0xff]
      %v312 = vld [vmem:[%s262 + $0xf0] sm:$0xff]
      %v313 = vld [vmem:[%s262 + $0xf8] sm:$0xff]
      %v314 = vld [vmem:[%s1] sm:$0xff]
      %v315 = vld [vmem:[%s1 + $0x8] sm:$0xff]
      %vm316 = vcmask 130048
      %v318 = vsel %vm316, %v282, 0
      %v321 = vsel %vm316, %v283, 0
      %v324 = vsel %vm316, %v284, 0
      %v327 = vsel %vm316, %v285, 0
      %v330 = vsel %vm316, %v286, 0
      %v333 = vsel %vm316, %v287, 0
      %v336 = vsel %vm316, %v288, 0
      %v339 = vsel %vm316, %v289, 0
      %v342 = vsel %vm316, %v290, 0
      %v345 = vsel %vm316, %v291, 0
      %v348 = vsel %vm316, %v292, 0
      %v351 = vsel %vm316, %v293, 0
      %v354 = vsel %vm316, %v294, 0
      %v357 = vsel %vm316, %v295, 0
      %v360 = vsel %vm316, %v296, 0
      %v363 = vsel %vm316, %v297, 0
      %v366 = vsel %vm316, %v298, 0
      %v369 = vsel %vm316, %v299, 0
      %v372 = vsel %vm316, %v300, 0
      %v375 = vsel %vm316, %v301, 0
      %v378 = vsel %vm316, %v302, 0
      %v381 = vsel %vm316, %v303, 0
      %v384 = vsel %vm316, %v304, 0
      %v387 = vsel %vm316, %v305, 0
      %v390 = vsel %vm316, %v306, 0
      %v393 = vsel %vm316, %v307, 0
      %v396 = vsel %vm316, %v308, 0
      %v399 = vsel %vm316, %v309, 0
      %v402 = vsel %vm316, %v310, 0
      %v405 = vsel %vm316, %v311, 0
      %v408 = vsel %vm316, %v312, 0
      %v411 = vsel %vm316, %v313, 0
      %413 = vmatprep.subr.mxu0 0.0
      %414 = vmatpush1.msra.mxu0 %v314
      %415 = vmatprep.subr.mxu0 0.0
      %416 = vmatpush1.msra.mxu0 %v315
      %417 = vmatprep.subr.mxu0 0.0
      %418 = vmatpush1.msra.mxu0 0.0
      %419 = vmatprep.subr.mxu0 0.0
      %420 = vmatpush1.msra.mxu0 0.0
      %421 = vmatprep.subr.mxu0 0.0
      %422 = vmatpush1.msra.mxu0 0.0
      %423 = vmatprep.subr.mxu0 0.0
      %424 = vmatpush1.msra.mxu0 0.0
      %425 = vmatprep.subr.mxu0 0.0
      %426 = vmatpush1.msra.mxu0 0.0
      %427 = vmatprep.subr.mxu0 0.0
      %428 = vmatpush1.msra.mxu0 0.0
      %429 = vmatprep.subr.mxu0 0.0
      %430 = vmatpush1.msra.mxu0 0.0
      %431 = vmatprep.subr.mxu0 0.0
      %432 = vmatpush1.msra.mxu0 0.0
      %433 = vmatprep.subr.mxu0 0.0
      %434 = vmatpush1.msra.mxu0 0.0
      %435 = vmatprep.subr.mxu0 0.0
      %436 = vmatpush1.msra.mxu0 0.0
      %437 = vmatprep.subr.mxu0 0.0
      %438 = vmatpush1.msra.mxu0 0.0
      %439 = vmatprep.subr.mxu0 0.0
      %440 = vmatpush1.msra.mxu0 0.0
      %441 = vmatprep.subr.mxu0 0.0
      %442 = vmatpush1.msra.mxu0 0.0
      %443 = vmatprep.subr.mxu0 0.0
      %444 = vmatpush1.msra.mxu0 0.0
      %445 = vmatprep.subr.mxu0 0.0
      %446 = vmatpush1.msra.mxu0 0.0
      %447 = vmatprep.subr.mxu0 0.0
      %448 = vmatpush1.msra.mxu0 0.0
      %449 = vmatprep.subr.mxu0 0.0
      %450 = vmatpush1.msra.mxu0 0.0
      %451 = vmatprep.subr.mxu0 0.0
      %452 = vmatpush1.msra.mxu0 0.0
      %453 = vmatprep.subr.mxu0 0.0
      %454 = vmatpush1.msra.mxu0 0.0
      %455 = vmatprep.subr.mxu0 0.0
      %456 = vmatpush1.msra.mxu0 0.0
      %457 = vmatprep.subr.mxu0 0.0
      %458 = vmatpush1.msra.mxu0 0.0
      %459 = vmatprep.subr.mxu0 0.0
      %460 = vmatpush1.msra.mxu0 0.0
      %461 = vmatprep.subr.mxu0 0.0
      %462 = vmatpush1.msra.mxu0 0.0
      %463 = vmatprep.subr.mxu0 0.0
      %464 = vmatpush1.msra.mxu0 0.0
      %465 = vmatprep.subr.mxu0 0.0
      %466 = vmatpush1.msra.mxu0 0.0
      %467 = vmatprep.subr.mxu0 0.0
      %468 = vmatpush1.msra.mxu0 0.0
      %469 = vmatprep.subr.mxu0 0.0
      %470 = vmatpush1.msra.mxu0 0.0
      %471 = vmatprep.subr.mxu0 0.0
      %472 = vmatpush1.msra.mxu0 0.0
      %473 = vmatprep.subr.mxu0 0.0
      %474 = vmatpush1.msra.mxu0 0.0
      %475 = vmatprep.subr.mxu0 0.0
      %476 = vmatpush1.msra.mxu0 0.0
      %477 = vmatprep.mubr.f32.mxu0 0.0
      %478 = vmatmul.mubr.f32.gmra.mrb[0].mxu0 %v318
      %v479 = vpop.f32.mrb[0].mxu0
      %v480 = vadd.f32 0.0, %v479
      %v481 = vpop.f32.mrb[0].mxu0
      %482 = vmatprep.mubr.f32.mxu0 0.0
      %483 = vmatmul.mubr.f32.gmra.mrb[0].mxu0 %v321
      %v484 = vpop.f32.mrb[0].mxu0
      %v485 = vadd.f32 0.0, %v484
      %v486 = vpop.f32.mrb[0].mxu0
      %487 = vmatprep.mubr.f32.mxu0 0.0
      %488 = vmatmul.mubr.f32.gmra.mrb[0].mxu0 %v324
      %v489 = vpop.f32.mrb[0].mxu0
      %v490 = vadd.f32 0.0, %v489
      %v491 = vpop.f32.mrb[0].mxu0
      %492 = vmatprep.mubr.f32.mxu0 0.0
      %493 = vmatmul.mubr.f32.gmra.mrb[0].mxu0 %v327
      %v494 = vpop.f32.mrb[0].mxu0
      %v495 = vadd.f32 0.0, %v494
      %v496 = vpop.f32.mrb[0].mxu0
      %497 = vmatprep.mubr.f32.mxu0 0.0
      %498 = vmatmul.mubr.f32.gmra.mrb[0].mxu0 %v330
      %v499 = vpop.f32.mrb[0].mxu0
      %v500 = vadd.f32 0.0, %v499
      %v501 = vpop.f32.mrb[0].mxu0
      %502 = vmatprep.mubr.f32.mxu0 0.0
      %503 = vmatmul.mubr.f32.gmra.mrb[0].mxu0 %v333
      %v504 = vpop.f32.mrb[0].mxu0
      %v505 = vadd.f32 0.0, %v504
      %v506 = vpop.f32.mrb[0].mxu0
      %507 = vmatprep.mubr.f32.mxu0 0.0
      %508 = vmatmul.mubr.f32.gmra.mrb[0].mxu0 %v336
      %v509 = vpop.f32.mrb[0].mxu0
      %v510 = vadd.f32 0.0, %v509
      %v511 = vpop.f32.mrb[0].mxu0
      %512 = vmatprep.mubr.f32.mxu0 0.0
      %513 = vmatmul.mubr.f32.gmra.mrb[0].mxu0 %v339
      %v514 = vpop.f32.mrb[0].mxu0
      %v515 = vadd.f32 0.0, %v514
      %v516 = vpop.f32.mrb[0].mxu0
      %517 = vmatprep.mubr.f32.mxu0 0.0
      %518 = vmatmul.mubr.f32.gmra.mrb[0].mxu0 %v342
      %v519 = vpop.f32.mrb[0].mxu0
      %v520 = vadd.f32 0.0, %v519
      %v521 = vpop.f32.mrb[0].mxu0
      %522 = vmatprep.mubr.f32.mxu0 0.0
      %523 = vmatmul.mubr.f32.gmra.mrb[0].mxu0 %v345
      %v524 = vpop.f32.mrb[0].mxu0
      %v525 = vadd.f32 0.0, %v524
      %v526 = vpop.f32.mrb[0].mxu0
      %527 = vmatprep.mubr.f32.mxu0 0.0
      %528 = vmatmul.mubr.f32.gmra.mrb[0].mxu0 %v348
      %v529 = vpop.f32.mrb[0].mxu0
      %v530 = vadd.f32 0.0, %v529
      %v531 = vpop.f32.mrb[0].mxu0
      %532 = vmatprep.mubr.f32.mxu0 0.0
      %533 = vmatmul.mubr.f32.gmra.mrb[0].mxu0 %v351
      %v534 = vpop.f32.mrb[0].mxu0
      %v535 = vadd.f32 0.0, %v534
      %v536 = vpop.f32.mrb[0].mxu0
      %537 = vmatprep.mubr.f32.mxu0 0.0
      %538 = vmatmul.mubr.f32.gmra.mrb[0].mxu0 %v354
      %v539 = vpop.f32.mrb[0].mxu0
      %v540 = vadd.f32 0.0, %v539
      %v541 = vpop.f32.mrb[0].mxu0
      %542 = vmatprep.mubr.f32.mxu0 0.0
      %543 = vmatmul.mubr.f32.gmra.mrb[0].mxu0 %v357
      %v544 = vpop.f32.mrb[0].mxu0
      %v545 = vadd.f32 0.0, %v544
      %v546 = vpop.f32.mrb[0].mxu0
      %547 = vmatprep.mubr.f32.mxu0 0.0
      %548 = vmatmul.mubr.f32.gmra.mrb[0].mxu0 %v360
      %v549 = vpop.f32.mrb[0].mxu0
      %v550 = vadd.f32 0.0, %v549
      %v551 = vpop.f32.mrb[0].mxu0
      %552 = vmatprep.mubr.f32.mxu0 0.0
      %553 = vmatmul.mubr.f32.gmra.mrb[0].mxu0 %v363
      %v554 = vpop.f32.mrb[0].mxu0
      %v555 = vadd.f32 0.0, %v554
      %v556 = vpop.f32.mrb[0].mxu0
      %557 = vmatprep.mubr.f32.mxu0 0.0
      %558 = vmatmul.mubr.f32.gmra.mrb[0].mxu0 %v366
      %v559 = vpop.f32.mrb[0].mxu0
      %v560 = vadd.f32 0.0, %v559
      %v561 = vpop.f32.mrb[0].mxu0
      %562 = vmatprep.mubr.f32.mxu0 0.0
      %563 = vmatmul.mubr.f32.gmra.mrb[0].mxu0 %v369
      %v564 = vpop.f32.mrb[0].mxu0
      %v565 = vadd.f32 0.0, %v564
      %v566 = vpop.f32.mrb[0].mxu0
      %567 = vmatprep.mubr.f32.mxu0 0.0
      %568 = vmatmul.mubr.f32.gmra.mrb[0].mxu0 %v372
      %v569 = vpop.f32.mrb[0].mxu0
      %v570 = vadd.f32 0.0, %v569
      %v571 = vpop.f32.mrb[0].mxu0
      %572 = vmatprep.mubr.f32.mxu0 0.0
      %573 = vmatmul.mubr.f32.gmra.mrb[0].mxu0 %v375
      %v574 = vpop.f32.mrb[0].mxu0
      %v575 = vadd.f32 0.0, %v574
      %v576 = vpop.f32.mrb[0].mxu0
      %577 = vmatprep.mubr.f32.mxu0 0.0
      %578 = vmatmul.mubr.f32.gmra.mrb[0].mxu0 %v378
      %v579 = vpop.f32.mrb[0].mxu0
      %v580 = vadd.f32 0.0, %v579
      %v581 = vpop.f32.mrb[0].mxu0
      %582 = vmatprep.mubr.f32.mxu0 0.0
      %583 = vmatmul.mubr.f32.gmra.mrb[0].mxu0 %v381
      %v584 = vpop.f32.mrb[0].mxu0
      %v585 = vadd.f32 0.0, %v584
      %v586 = vpop.f32.mrb[0].mxu0
      %587 = vmatprep.mubr.f32.mxu0 0.0
      %588 = vmatmul.mubr.f32.gmra.mrb[0].mxu0 %v384
      %v589 = vpop.f32.mrb[0].mxu0
      %v590 = vadd.f32 0.0, %v589
      %v591 = vpop.f32.mrb[0].mxu0
      %592 = vmatprep.mubr.f32.mxu0 0.0
      %593 = vmatmul.mubr.f32.gmra.mrb[0].mxu0 %v387
      %v594 = vpop.f32.mrb[0].mxu0
      %v595 = vadd.f32 0.0, %v594
      %v596 = vpop.f32.mrb[0].mxu0
      %597 = vmatprep.mubr.f32.mxu0 0.0
      %598 = vmatmul.mubr.f32.gmra.mrb[0].mxu0 %v390
      %v599 = vpop.f32.mrb[0].mxu0
      %v600 = vadd.f32 0.0, %v599
      %v601 = vpop.f32.mrb[0].mxu0
      %602 = vmatprep.mubr.f32.mxu0 0.0
      %603 = vmatmul.mubr.f32.gmra.mrb[0].mxu0 %v393
      %v604 = vpop.f32.mrb[0].mxu0
      %v605 = vadd.f32 0.0, %v604
      %v606 = vpop.f32.mrb[0].mxu0
      %607 = vmatprep.mubr.f32.mxu0 0.0
      %608 = vmatmul.mubr.f32.gmra.mrb[0].mxu0 %v396
      %v609 = vpop.f32.mrb[0].mxu0
      %v610 = vadd.f32 0.0, %v609
      %v611 = vpop.f32.mrb[0].mxu0
      %612 = vmatprep.mubr.f32.mxu0 0.0
      %613 = vmatmul.mubr.f32.gmra.mrb[0].mxu0 %v399
      %v614 = vpop.f32.mrb[0].mxu0
      %v615 = vadd.f32 0.0, %v614
      %v616 = vpop.f32.mrb[0].mxu0
      %617 = vmatprep.mubr.f32.mxu0 0.0
      %618 = vmatmul.mubr.f32.gmra.mrb[0].mxu0 %v402
      %v619 = vpop.f32.mrb[0].mxu0
      %v620 = vadd.f32 0.0, %v619
      %v621 = vpop.f32.mrb[0].mxu0
      %622 = vmatprep.mubr.f32.mxu0 0.0
      %623 = vmatmul.mubr.f32.gmra.mrb[0].mxu0 %v405
      %v624 = vpop.f32.mrb[0].mxu0
      %v625 = vadd.f32 0.0, %v624
      %v626 = vpop.f32.mrb[0].mxu0
      %627 = vmatprep.mubr.f32.mxu0 0.0
      %628 = vmatmul.mubr.f32.gmra.mrb[0].mxu0 %v408
      %v629 = vpop.f32.mrb[0].mxu0
      %v630 = vadd.f32 0.0, %v629
      %v631 = vpop.f32.mrb[0].mxu0
      %632 = vmatprep.mubr.f32.mxu0 0.0
      %633 = vmatmul.mubr.f32.gmra.mrb[0].mxu0 %v411
      %v634 = vpop.f32.mrb[0].mxu0
      %v635 = vadd.f32 0.0, %v634
      %v636 = vpop.f32.mrb[0].mxu0
      %637 = vdwg.mxu0
      %v638 = vpack.c.bf16 %v485, %v480
      %v639 = vpack.c.bf16 %v495, %v490
      %v640 = vpack.c.bf16 %v505, %v500
      %v641 = vpack.c.bf16 %v515, %v510
      %v642 = vpack.c.bf16 %v525, %v520
      %v643 = vpack.c.bf16 %v535, %v530
      %v644 = vpack.c.bf16 %v545, %v540
      %v645 = vpack.c.bf16 %v555, %v550
      %v646 = vpack.c.bf16 %v565, %v560
      %v647 = vpack.c.bf16 %v575, %v570
      %v648 = vpack.c.bf16 %v585, %v580
      %v649 = vpack.c.bf16 %v595, %v590
      %v650 = vpack.c.bf16 %v605, %v600
      %v651 = vpack.c.bf16 %v615, %v610
      %v652 = vpack.c.bf16 %v625, %v620
      %v653 = vpack.c.bf16 %v635, %v630
      %v670 = vunpack.c.l.b16 %v638
      %v671 = vunpack.c.h.b16 %v638
      %v672 = vunpack.c.l.b16 %v639
      %v673 = vunpack.c.h.b16 %v639
      %v674 = vunpack.c.l.b16 %v640
      %v675 = vunpack.c.h.b16 %v640
      %v676 = vunpack.c.l.b16 %v641
      %v677 = vunpack.c.h.b16 %v641
      %v678 = vunpack.c.l.b16 %v642
      %v679 = vunpack.c.h.b16 %v642
      %v680 = vunpack.c.l.b16 %v643
      %v681 = vunpack.c.h.b16 %v643
      %v682 = vunpack.c.l.b16 %v644
      %v683 = vunpack.c.h.b16 %v644
      %v684 = vunpack.c.l.b16 %v645
      %v685 = vunpack.c.h.b16 %v645
      %v686 = vunpack.c.l.b16 %v646
      %v687 = vunpack.c.h.b16 %v646
      %v688 = vunpack.c.l.b16 %v647
      %v689 = vunpack.c.h.b16 %v647
      %v690 = vunpack.c.l.b16 %v648
      %v691 = vunpack.c.h.b16 %v648
      %v692 = vunpack.c.l.b16 %v649
      %v693 = vunpack.c.h.b16 %v649
      %v694 = vunpack.c.l.b16 %v650
      %v695 = vunpack.c.h.b16 %v650
      %v696 = vunpack.c.l.b16 %v651
      %v697 = vunpack.c.h.b16 %v651
      %v698 = vunpack.c.l.b16 %v652
      %v699 = vunpack.c.h.b16 %v652
      %v700 = vunpack.c.l.b16 %v653
      %v701 = vunpack.c.h.b16 %v653
      %v702 = vpack.c.b16 %v670, %v670
      %v703 = vpack.c.b16 %v671, %v671
      %v704 = vpack.c.b16 %v672, %v672
      %v705 = vpack.c.b16 %v673, %v673
      %v706 = vpack.c.b16 %v674, %v674
      %v707 = vpack.c.b16 %v675, %v675
      %v708 = vpack.c.b16 %v676, %v676
      %v709 = vpack.c.b16 %v677, %v677
      %v710 = vpack.c.b16 %v678, %v678
      %v711 = vpack.c.b16 %v679, %v679
      %v712 = vpack.c.b16 %v680, %v680
      %v713 = vpack.c.b16 %v681, %v681
      %v714 = vpack.c.b16 %v682, %v682
      %v715 = vpack.c.b16 %v683, %v683
      %v716 = vpack.c.b16 %v684, %v684
      %v717 = vpack.c.b16 %v685, %v685
      %v718 = vpack.c.b16 %v686, %v686
      %v719 = vpack.c.b16 %v687, %v687
      %v720 = vpack.c.b16 %v688, %v688
      %v721 = vpack.c.b16 %v689, %v689
      %v722 = vpack.c.b16 %v690, %v690
      %v723 = vpack.c.b16 %v691, %v691
      %v724 = vpack.c.b16 %v692, %v692
      %v725 = vpack.c.b16 %v693, %v693
      %v726 = vpack.c.b16 %v694, %v694
      %v727 = vpack.c.b16 %v695, %v695
      %v728 = vpack.c.b16 %v696, %v696
      %v729 = vpack.c.b16 %v697, %v697
      %v730 = vpack.c.b16 %v698, %v698
      %v731 = vpack.c.b16 %v699, %v699
      %v732 = vpack.c.b16 %v700, %v700
      %v733 = vpack.c.b16 %v701, %v701
      %vm766 = vcmask 125952
      %767 = vst.msk [vmem:[%s268] sm:$0xf] %vm766, %v702
      %768 = vst.msk [vmem:[%s268 + $0x4] sm:$0xf] %vm766, %v703
      %769 = vst.msk [vmem:[%s268 + $0x8] sm:$0xf] %vm766, %v704
      %770 = vst.msk [vmem:[%s268 + $0xc] sm:$0xf] %vm766, %v705
      %771 = vst.msk [vmem:[%s268 + $0x10] sm:$0xf] %vm766, %v706
      %772 = vst.msk [vmem:[%s268 + $0x14] sm:$0xf] %vm766, %v707
      %773 = vst.msk [vmem:[%s268 + $0x18] sm:$0xf] %vm766, %v708
      %774 = vst.msk [vmem:[%s268 + $0x1c] sm:$0xf] %vm766, %v709
      %775 = vst.msk [vmem:[%s268 + $0x20] sm:$0xf] %vm766, %v710
      %776 = vst.msk [vmem:[%s268 + $0x24] sm:$0xf] %vm766, %v711
      %777 = vst.msk [vmem:[%s268 + $0x28] sm:$0xf] %vm766, %v712
      %778 = vst.msk [vmem:[%s268 + $0x2c] sm:$0xf] %vm766, %v713
      %779 = vst.msk [vmem:[%s268 + $0x30] sm:$0xf] %vm766, %v714
      %780 = vst.msk [vmem:[%s268 + $0x34] sm:$0xf] %vm766, %v715
      %781 = vst.msk [vmem:[%s268 + $0x38] sm:$0xf] %vm766, %v716
      %782 = vst.msk [vmem:[%s268 + $0x3c] sm:$0xf] %vm766, %v717
      %783 = vst.msk [vmem:[%s268 + $0x40] sm:$0xf] %vm766, %v718
      %784 = vst.msk [vmem:[%s268 + $0x44] sm:$0xf] %vm766, %v719
      %785 = vst.msk [vmem:[%s268 + $0x48] sm:$0xf] %vm766, %v720
      %786 = vst.msk [vmem:[%s268 + $0x4c] sm:$0xf] %vm766, %v721
      %787 = vst.msk [vmem:[%s268 + $0x50] sm:$0xf] %vm766, %v722
      %788 = vst.msk [vmem:[%s268 + $0x54] sm:$0xf] %vm766, %v723
      %789 = vst.msk [vmem:[%s268 + $0x58] sm:$0xf] %vm766, %v724
      %790 = vst.msk [vmem:[%s268 + $0x5c] sm:$0xf] %vm766, %v725
      %791 = vst.msk [vmem:[%s268 + $0x60] sm:$0xf] %vm766, %v726
      %792 = vst.msk [vmem:[%s268 + $0x64] sm:$0xf] %vm766, %v727
      %793 = vst.msk [vmem:[%s268 + $0x68] sm:$0xf] %vm766, %v728
      %794 = vst.msk [vmem:[%s268 + $0x6c] sm:$0xf] %vm766, %v729
      %795 = vst.msk [vmem:[%s268 + $0x70] sm:$0xf] %vm766, %v730
      %796 = vst.msk [vmem:[%s268 + $0x74] sm:$0xf] %vm766, %v731
      %797 = vst.msk [vmem:[%s268 + $0x78] sm:$0xf] %vm766, %v732
      %798 = vst.msk [vmem:[%s268 + $0x7c] sm:$0xf] %vm766, %v733
      %v799 = vld [vmem:[%s2] sm:$0x1]
      %v801 = vlaneseq
      %v802 = vshrl.u32 %v801, 7
      %v803 = vsub.s32 0, %v802
      %v804 = vrot.slane %v799, %v803
      %v806 = vmul.f32 %v480, %v804
      %v807 = vmul.f32 %v485, %v804
      %v808 = vmul.f32 %v490, %v804
      %v809 = vmul.f32 %v495, %v804
      %v810 = vmul.f32 %v500, %v804
      %v811 = vmul.f32 %v505, %v804
      %v812 = vmul.f32 %v510, %v804
      %v813 = vmul.f32 %v515, %v804
      %v814 = vmul.f32 %v520, %v804
      %v815 = vmul.f32 %v525, %v804
      %v816 = vmul.f32 %v530, %v804
      %v817 = vmul.f32 %v535, %v804
      %v818 = vmul.f32 %v540, %v804
      %v819 = vmul.f32 %v545, %v804
      %v820 = vmul.f32 %v550, %v804
      %v821 = vmul.f32 %v555, %v804
      %v822 = vmul.f32 %v560, %v804
      %v823 = vmul.f32 %v565, %v804
      %v824 = vmul.f32 %v570, %v804
      %v825 = vmul.f32 %v575, %v804
      %v826 = vmul.f32 %v580, %v804
      %v827 = vmul.f32 %v585, %v804
      %v828 = vmul.f32 %v590, %v804
      %v829 = vmul.f32 %v595, %v804
      %v830 = vmul.f32 %v600, %v804
      %v831 = vmul.f32 %v605, %v804
      %v832 = vmul.f32 %v610, %v804
      %v833 = vmul.f32 %v615, %v804
      %v834 = vmul.f32 %v620, %v804
      %v835 = vmul.f32 %v625, %v804
      %v836 = vmul.f32 %v630, %v804
      %v837 = vmul.f32 %v635, %v804
      %v838 = vsel %vm316, %v806, 0.0
      %839 = vadd.xlane.f32.xlu0 %v838
      %v840 = vpop.xlane.xlu0 %839
      %v841 = vsel %vm316, %v807, 0.0
      %842 = vadd.xlane.f32.xlu0 %v841
      %v843 = vpop.xlane.xlu0 %842
      %v844 = vsel %vm316, %v808, 0.0
      %845 = vadd.xlane.f32.xlu0 %v844
      %v846 = vpop.xlane.xlu0 %845
      %v847 = vsel %vm316, %v809, 0.0
      %848 = vadd.xlane.f32.xlu0 %v847
      %v849 = vpop.xlane.xlu0 %848
      %v850 = vsel %vm316, %v810, 0.0
      %851 = vadd.xlane.f32.xlu0 %v850
      %v852 = vpop.xlane.xlu0 %851
      %v853 = vsel %vm316, %v811, 0.0
      %854 = vadd.xlane.f32.xlu0 %v853
      %v855 = vpop.xlane.xlu0 %854
      %v856 = vsel %vm316, %v812, 0.0
      %857 = vadd.xlane.f32.xlu0 %v856
      %v858 = vpop.xlane.xlu0 %857
      %v859 = vsel %vm316, %v813, 0.0
      %860 = vadd.xlane.f32.xlu0 %v859
      %v861 = vpop.xlane.xlu0 %860
      %v862 = vsel %vm316, %v814, 0.0
      %863 = vadd.xlane.f32.xlu0 %v862
      %v864 = vpop.xlane.xlu0 %863
      %v865 = vsel %vm316, %v815, 0.0
      %866 = vadd.xlane.f32.xlu0 %v865
      %v867 = vpop.xlane.xlu0 %866
      %v868 = vsel %vm316, %v816, 0.0
      %869 = vadd.xlane.f32.xlu0 %v868
      %v870 = vpop.xlane.xlu0 %869
      %v871 = vsel %vm316, %v817, 0.0
      %872 = vadd.xlane.f32.xlu0 %v871
      %v873 = vpop.xlane.xlu0 %872
      %v874 = vsel %vm316, %v818, 0.0
      %875 = vadd.xlane.f32.xlu0 %v874
      %v876 = vpop.xlane.xlu0 %875
      %v877 = vsel %vm316, %v819, 0.0
      %878 = vadd.xlane.f32.xlu0 %v877
      %v879 = vpop.xlane.xlu0 %878
      %v880 = vsel %vm316, %v820, 0.0
      %881 = vadd.xlane.f32.xlu0 %v880
      %v882 = vpop.xlane.xlu0 %881
      %v883 = vsel %vm316, %v821, 0.0
      %884 = vadd.xlane.f32.xlu0 %v883
      %v885 = vpop.xlane.xlu0 %884
      %v886 = vsel %vm316, %v822, 0.0
      %887 = vadd.xlane.f32.xlu0 %v886
      %v888 = vpop.xlane.xlu0 %887
      %v889 = vsel %vm316, %v823, 0.0
      %890 = vadd.xlane.f32.xlu0 %v889
      %v891 = vpop.xlane.xlu0 %890
      %v892 = vsel %vm316, %v824, 0.0
      %893 = vadd.xlane.f32.xlu0 %v892
      %v894 = vpop.xlane.xlu0 %893
      %v895 = vsel %vm316, %v825, 0.0
      %896 = vadd.xlane.f32.xlu0 %v895
      %v897 = vpop.xlane.xlu0 %896
      %v898 = vsel %vm316, %v826, 0.0
      %899 = vadd.xlane.f32.xlu0 %v898
      %v900 = vpop.xlane.xlu0 %899
      %v901 = vsel %vm316, %v827, 0.0
      %902 = vadd.xlane.f32.xlu0 %v901
      %v903 = vpop.xlane.xlu0 %902
      %v904 = vsel %vm316, %v828, 0.0
      %905 = vadd.xlane.f32.xlu0 %v904
      %v906 = vpop.xlane.xlu0 %905
      %v907 = vsel %vm316, %v829, 0.0
      %908 = vadd.xlane.f32.xlu0 %v907
      %v909 = vpop.xlane.xlu0 %908
      %v910 = vsel %vm316, %v830, 0.0
      %911 = vadd.xlane.f32.xlu0 %v910
      %v912 = vpop.xlane.xlu0 %911
      %v913 = vsel %vm316, %v831, 0.0
      %914 = vadd.xlane.f32.xlu0 %v913
      %v915 = vpop.xlane.xlu0 %914
      %v916 = vsel %vm316, %v832, 0.0
      %917 = vadd.xlane.f32.xlu0 %v916
      %v918 = vpop.xlane.xlu0 %917
      %v919 = vsel %vm316, %v833, 0.0
      %920 = vadd.xlane.f32.xlu0 %v919
      %v921 = vpop.xlane.xlu0 %920
      %v922 = vsel %vm316, %v834, 0.0
      %923 = vadd.xlane.f32.xlu0 %v922
      %v924 = vpop.xlane.xlu0 %923
      %v925 = vsel %vm316, %v835, 0.0
      %926 = vadd.xlane.f32.xlu0 %v925
      %v927 = vpop.xlane.xlu0 %926
      %v928 = vsel %vm316, %v836, 0.0
      %929 = vadd.xlane.f32.xlu0 %v928
      %v930 = vpop.xlane.xlu0 %929
      %v931 = vsel %vm316, %v837, 0.0
      %932 = vadd.xlane.f32.xlu0 %v931
      %v933 = vpop.xlane.xlu0 %932
      %vm934 = vcmask 7168
      %935 = vst.msk [vmem:[%s274] sm:$0xff] %vm934, %v840
      %936 = vst.msk [vmem:[%s274 + $0x8] sm:$0xff] %vm934, %v843
      %937 = vst.msk [vmem:[%s274 + $0x10] sm:$0xff] %vm934, %v846
      %938 = vst.msk [vmem:[%s274 + $0x18] sm:$0xff] %vm934, %v849
      %939 = vst.msk [vmem:[%s274 + $0x20] sm:$0xff] %vm934, %v852
      %940 = vst.msk [vmem:[%s274 + $0x28] sm:$0xff] %vm934, %v855
      %941 = vst.msk [vmem:[%s274 + $0x30] sm:$0xff] %vm934, %v858
      %942 = vst.msk [vmem:[%s274 + $0x38] sm:$0xff] %vm934, %v861
      %943 = vst.msk [vmem:[%s274 + $0x40] sm:$0xff] %vm934, %v864
      %944 = vst.msk [vmem:[%s274 + $0x48] sm:$0xff] %vm934, %v867
      %945 = vst.msk [vmem:[%s274 + $0x50] sm:$0xff] %vm934, %v870
      %946 = vst.msk [vmem:[%s274 + $0x58] sm:$0xff] %vm934, %v873
      %947 = vst.msk [vmem:[%s274 + $0x60] sm:$0xff] %vm934, %v876
      %948 = vst.msk [vmem:[%s274 + $0x68] sm:$0xff] %vm934, %v879
      %949 = vst.msk [vmem:[%s274 + $0x70] sm:$0xff] %vm934, %v882
      %950 = vst.msk [vmem:[%s274 + $0x78] sm:$0xff] %vm934, %v885
      %951 = vst.msk [vmem:[%s274 + $0x80] sm:$0xff] %vm934, %v888
      %952 = vst.msk [vmem:[%s274 + $0x88] sm:$0xff] %vm934, %v891
      %953 = vst.msk [vmem:[%s274 + $0x90] sm:$0xff] %vm934, %v894
      %954 = vst.msk [vmem:[%s274 + $0x98] sm:$0xff] %vm934, %v897
      %955 = vst.msk [vmem:[%s274 + $0xa0] sm:$0xff] %vm934, %v900
      %956 = vst.msk [vmem:[%s274 + $0xa8] sm:$0xff] %vm934, %v903
      %957 = vst.msk [vmem:[%s274 + $0xb0] sm:$0xff] %vm934, %v906
      %958 = vst.msk [vmem:[%s274 + $0xb8] sm:$0xff] %vm934, %v909
      %959 = vst.msk [vmem:[%s274 + $0xc0] sm:$0xff] %vm934, %v912
      %960 = vst.msk [vmem:[%s274 + $0xc8] sm:$0xff] %vm934, %v915
      %961 = vst.msk [vmem:[%s274 + $0xd0] sm:$0xff] %vm934, %v918
      %962 = vst.msk [vmem:[%s274 + $0xd8] sm:$0xff] %vm934, %v921
      %963 = vst.msk [vmem:[%s274 + $0xe0] sm:$0xff] %vm934, %v924
      %964 = vst.msk [vmem:[%s274 + $0xe8] sm:$0xff] %vm934, %v927
      %965 = vst.msk [vmem:[%s274 + $0xf0] sm:$0xff] %vm934, %v930
      %966 = vst.msk [vmem:[%s274 + $0xf8] sm:$0xff] %vm934, %v933
      %v967 = vld [vmem:[%s3] sm:$0x1]
      %v969 = vlaneseq
      %v970 = vshrl.u32 %v969, 7
      %v971 = vsub.s32 0, %v970
      %v972 = vrot.slane %v967, %v971
      %v974 = vmul.f32 %v480, %v972
      %v975 = vmul.f32 %v485, %v972
      %v976 = vmul.f32 %v490, %v972
      %v977 = vmul.f32 %v495, %v972
      %v978 = vmul.f32 %v500, %v972
      %v979 = vmul.f32 %v505, %v972
      %v980 = vmul.f32 %v510, %v972
      %v981 = vmul.f32 %v515, %v972
      %v982 = vmul.f32 %v520, %v972
      %v983 = vmul.f32 %v525, %v972
      %v984 = vmul.f32 %v530, %v972
      %v985 = vmul.f32 %v535, %v972
      %v986 = vmul.f32 %v540, %v972
      %v987 = vmul.f32 %v545, %v972
      %v988 = vmul.f32 %v550, %v972
      %v989 = vmul.f32 %v555, %v972
      %v990 = vmul.f32 %v560, %v972
      %v991 = vmul.f32 %v565, %v972
      %v992 = vmul.f32 %v570, %v972
      %v993 = vmul.f32 %v575, %v972
      %v994 = vmul.f32 %v580, %v972
      %v995 = vmul.f32 %v585, %v972
      %v996 = vmul.f32 %v590, %v972
      %v997 = vmul.f32 %v595, %v972
      %v998 = vmul.f32 %v600, %v972
      %v999 = vmul.f32 %v605, %v972
      %v1000 = vmul.f32 %v610, %v972
      %v1001 = vmul.f32 %v615, %v972
      %v1002 = vmul.f32 %v620, %v972
      %v1003 = vmul.f32 %v625, %v972
      %v1004 = vmul.f32 %v630, %v972
      %v1005 = vmul.f32 %v635, %v972
      %v1006 = vsel %vm316, %v974, 0.0
      %1007 = vadd.xlane.f32.xlu0 %v1006
      %v1008 = vpop.xlane.xlu0 %1007
      %v1009 = vsel %vm316, %v975, 0.0
      %1010 = vadd.xlane.f32.xlu0 %v1009
      %v1011 = vpop.xlane.xlu0 %1010
      %v1012 = vsel %vm316, %v976, 0.0
      %1013 = vadd.xlane.f32.xlu0 %v1012
      %v1014 = vpop.xlane.xlu0 %1013
      %v1015 = vsel %vm316, %v977, 0.0
      %1016 = vadd.xlane.f32.xlu0 %v1015
      %v1017 = vpop.xlane.xlu0 %1016
      %v1018 = vsel %vm316, %v978, 0.0
      %1019 = vadd.xlane.f32.xlu0 %v1018
      %v1020 = vpop.xlane.xlu0 %1019
      %v1021 = vsel %vm316, %v979, 0.0
      %1022 = vadd.xlane.f32.xlu0 %v1021
      %v1023 = vpop.xlane.xlu0 %1022
      %v1024 = vsel %vm316, %v980, 0.0
      %1025 = vadd.xlane.f32.xlu0 %v1024
      %v1026 = vpop.xlane.xlu0 %1025
      %v1027 = vsel %vm316, %v981, 0.0
      %1028 = vadd.xlane.f32.xlu0 %v1027
      %v1029 = vpop.xlane.xlu0 %1028
      %v1030 = vsel %vm316, %v982, 0.0
      %1031 = vadd.xlane.f32.xlu0 %v1030
      %v1032 = vpop.xlane.xlu0 %1031
      %v1033 = vsel %vm316, %v983, 0.0
      %1034 = vadd.xlane.f32.xlu0 %v1033
      %v1035 = vpop.xlane.xlu0 %1034
      %v1036 = vsel %vm316, %v984, 0.0
      %1037 = vadd.xlane.f32.xlu0 %v1036
      %v1038 = vpop.xlane.xlu0 %1037
      %v1039 = vsel %vm316, %v985, 0.0
      %1040 = vadd.xlane.f32.xlu0 %v1039
      %v1041 = vpop.xlane.xlu0 %1040
      %v1042 = vsel %vm316, %v986, 0.0
      %1043 = vadd.xlane.f32.xlu0 %v1042
      %v1044 = vpop.xlane.xlu0 %1043
      %v1045 = vsel %vm316, %v987, 0.0
      %1046 = vadd.xlane.f32.xlu0 %v1045
      %v1047 = vpop.xlane.xlu0 %1046
      %v1048 = vsel %vm316, %v988, 0.0
      %1049 = vadd.xlane.f32.xlu0 %v1048
      %v1050 = vpop.xlane.xlu0 %1049
      %v1051 = vsel %vm316, %v989, 0.0
      %1052 = vadd.xlane.f32.xlu0 %v1051
      %v1053 = vpop.xlane.xlu0 %1052
      %v1054 = vsel %vm316, %v990, 0.0
      %1055 = vadd.xlane.f32.xlu0 %v1054
      %v1056 = vpop.xlane.xlu0 %1055
      %v1057 = vsel %vm316, %v991, 0.0
      %1058 = vadd.xlane.f32.xlu0 %v1057
      %v1059 = vpop.xlane.xlu0 %1058
      %v1060 = vsel %vm316, %v992, 0.0
      %1061 = vadd.xlane.f32.xlu0 %v1060
      %v1062 = vpop.xlane.xlu0 %1061
      %v1063 = vsel %vm316, %v993, 0.0
      %1064 = vadd.xlane.f32.xlu0 %v1063
      %v1065 = vpop.xlane.xlu0 %1064
      %v1066 = vsel %vm316, %v994, 0.0
      %1067 = vadd.xlane.f32.xlu0 %v1066
      %v1068 = vpop.xlane.xlu0 %1067
      %v1069 = vsel %vm316, %v995, 0.0
      %1070 = vadd.xlane.f32.xlu0 %v1069
      %v1071 = vpop.xlane.xlu0 %1070
      %v1072 = vsel %vm316, %v996, 0.0
      %1073 = vadd.xlane.f32.xlu0 %v1072
      %v1074 = vpop.xlane.xlu0 %1073
      %v1075 = vsel %vm316, %v997, 0.0
      %1076 = vadd.xlane.f32.xlu0 %v1075
      %v1077 = vpop.xlane.xlu0 %1076
      %v1078 = vsel %vm316, %v998, 0.0
      %1079 = vadd.xlane.f32.xlu0 %v1078
      %v1080 = vpop.xlane.xlu0 %1079
      %v1081 = vsel %vm316, %v999, 0.0
      %1082 = vadd.xlane.f32.xlu0 %v1081
      %v1083 = vpop.xlane.xlu0 %1082
      %v1084 = vsel %vm316, %v1000, 0.0
      %1085 = vadd.xlane.f32.xlu0 %v1084
      %v1086 = vpop.xlane.xlu0 %1085
      %v1087 = vsel %vm316, %v1001, 0.0
      %1088 = vadd.xlane.f32.xlu0 %v1087
      %v1089 = vpop.xlane.xlu0 %1088
      %v1090 = vsel %vm316, %v1002, 0.0
      %1091 = vadd.xlane.f32.xlu0 %v1090
      %v1092 = vpop.xlane.xlu0 %1091
      %v1093 = vsel %vm316, %v1003, 0.0
      %1094 = vadd.xlane.f32.xlu0 %v1093
      %v1095 = vpop.xlane.xlu0 %1094
      %v1096 = vsel %vm316, %v1004, 0.0
      %1097 = vadd.xlane.f32.xlu0 %v1096
      %v1098 = vpop.xlane.xlu0 %1097
      %v1099 = vsel %vm316, %v1005, 0.0
      %1100 = vadd.xlane.f32.xlu0 %v1099
      %v1101 = vpop.xlane.xlu0 %1100
      %1102 = vst.msk [vmem:[%s280] sm:$0xff] %vm934, %v1008
      %1103 = vst.msk [vmem:[%s280 + $0x8] sm:$0xff] %vm934, %v1011
      %1104 = vst.msk [vmem:[%s280 + $0x10] sm:$0xff] %vm934, %v1014
      %1105 = vst.msk [vmem:[%s280 + $0x18] sm:$0xff] %vm934, %v1017
      %1106 = vst.msk [vmem:[%s280 + $0x20] sm:$0xff] %vm934, %v1020
      %1107 = vst.msk [vmem:[%s280 + $0x28] sm:$0xff] %vm934, %v1023
      %1108 = vst.msk [vmem:[%s280 + $0x30] sm:$0xff] %vm934, %v1026
      %1109 = vst.msk [vmem:[%s280 + $0x38] sm:$0xff] %vm934, %v1029
      %1110 = vst.msk [vmem:[%s280 + $0x40] sm:$0xff] %vm934, %v1032
      %1111 = vst.msk [vmem:[%s280 + $0x48] sm:$0xff] %vm934, %v1035
      %1112 = vst.msk [vmem:[%s280 + $0x50] sm:$0xff] %vm934, %v1038
      %1113 = vst.msk [vmem:[%s280 + $0x58] sm:$0xff] %vm934, %v1041
      %1114 = vst.msk [vmem:[%s280 + $0x60] sm:$0xff] %vm934, %v1044
      %1115 = vst.msk [vmem:[%s280 + $0x68] sm:$0xff] %vm934, %v1047
      %1116 = vst.msk [vmem:[%s280 + $0x70] sm:$0xff] %vm934, %v1050
      %1117 = vst.msk [vmem:[%s280 + $0x78] sm:$0xff] %vm934, %v1053
      %1118 = vst.msk [vmem:[%s280 + $0x80] sm:$0xff] %vm934, %v1056
      %1119 = vst.msk [vmem:[%s280 + $0x88] sm:$0xff] %vm934, %v1059
      %1120 = vst.msk [vmem:[%s280 + $0x90] sm:$0xff] %vm934, %v1062
      %1121 = vst.msk [vmem:[%s280 + $0x98] sm:$0xff] %vm934, %v1065
      %1122 = vst.msk [vmem:[%s280 + $0xa0] sm:$0xff] %vm934, %v1068
      %1123 = vst.msk [vmem:[%s280 + $0xa8] sm:$0xff] %vm934, %v1071
      %1124 = vst.msk [vmem:[%s280 + $0xb0] sm:$0xff] %vm934, %v1074
      %1125 = vst.msk [vmem:[%s280 + $0xb8] sm:$0xff] %vm934, %v1077
      %1126 = vst.msk [vmem:[%s280 + $0xc0] sm:$0xff] %vm934, %v1080
      %1127 = vst.msk [vmem:[%s280 + $0xc8] sm:$0xff] %vm934, %v1083
      %1128 = vst.msk [vmem:[%s280 + $0xd0] sm:$0xff] %vm934, %v1086
      %1129 = vst.msk [vmem:[%s280 + $0xd8] sm:$0xff] %vm934, %v1089
      %1130 = vst.msk [vmem:[%s280 + $0xe0] sm:$0xff] %vm934, %v1092
      %1131 = vst.msk [vmem:[%s280 + $0xe8] sm:$0xff] %vm934, %v1095
      %1132 = vst.msk [vmem:[%s280 + $0xf0] sm:$0xff] %vm934, %v1098
      %1133 = vst.msk [vmem:[%s280 + $0xf8] sm:$0xff] %vm934, %v1101
      %s1134 = smul.u32 32, %s18
      %p1135 = scmp.lt.s32.totalorder %s1134, 127
      %s1136 = scalar_select %p1135, %s1134, 127
      %s1137 = smul.addr %s1136, 4
      %s1138 = scalar_lea.vmem %s4, %s1137
      %s1139 = smul.u32 32, %s18
      %p1140 = scmp.lt.s32.totalorder %s1139, 127
      %s1141 = scalar_select %p1140, %s1139, 127
      %s1142 = smul.addr %s1141, 8
      %s1143 = scalar_lea.vmem %s5, %s1142
      %s1144 = smul.u32 32, %s18
      %p1145 = scmp.lt.s32.totalorder %s1144, 127
      %s1146 = scalar_select %p1145, %s1144, 127
      %s1147 = smul.addr %s1146, 8
      %s1148 = scalar_lea.vmem %s6, %s1147
      // Predicated region
      $region37: #{tpu_custom_call.1} parent=35 // pred_check
        %p1149 = pneg %p125
      $region38: #{tpu_custom_call.1} parent=35 // pred_check_branch
        %1151 = sbr.rel (%p1149) target = $region40
      $region39: #{tpu_custom_call.1} parent=35 // pred_region
        %s1152 = smul.u32 32, %s18
      $region40: #{tpu_custom_call.1} parent=35 // pred_fallthru
        _
      // Predicated region
      $region41: #{tpu_custom_call.1} parent=35 // pred_check
        %p1153 = pneg %p151
      $region42: #{tpu_custom_call.1} parent=35 // pred_check_branch
        %1155 = sbr.rel (%p1153) target = $region44
      $region43: #{tpu_custom_call.1} parent=35 // pred_region
        %s1156 = smul.u32 32, %s18
      $region44: #{tpu_custom_call.1} parent=35 // pred_fallthru
        _
      // Predicated region
      $region45: #{tpu_custom_call.1} parent=35 // pred_check
        %p1157 = pneg %p177
      $region46: #{tpu_custom_call.1} parent=35 // pred_check_branch
        %1159 = sbr.rel (%p1157) target = $region48
      $region47: #{tpu_custom_call.1} parent=35 // pred_region
        %s1160 = smul.u32 32, %s18
      $region48: #{tpu_custom_call.1} parent=35 // pred_fallthru
        _
    $region36: #{tpu_custom_call.1} parent=5 // pred_fallthru
      _
    %p1161 = scmp.le.s32.totalorder 2, %s13
    // Predicated region
    $region49: #{tpu_custom_call.1} parent=5 // pred_check
      %p1162 = pneg %p1161
    $region50: #{tpu_custom_call.1} parent=5 // pred_check_branch
      %1164 = sbr.rel (%p1162) target = $region52
    $region51: #{tpu_custom_call.1} parent=5 // pred_region
      %s1165 = ssub.s32 %s13, 2
      // Predicated region
      $region53: #{tpu_custom_call.1} parent=51 // pred_check
        %p1166 = pneg %p131
      $region54: #{tpu_custom_call.1} parent=51 // pred_check_branch
        %1168 = sbr.rel (%p1166) target = $region56
      $region55: #{tpu_custom_call.1} parent=51 // pred_region
        %s1169 = smul.u32 32, %s19
        %p1170 = scmp.lt.s32.totalorder %s1169, 127
        %s1171 = scalar_select %p1170, %s1169, 127
        %s1172 = smul.addr %s1171, 4
        %s1173 = scalar_lea.vmem %s4, %s1172
      $region56: #{tpu_custom_call.1} parent=51 // pred_fallthru
        _
      // Predicated region
      $region57: #{tpu_custom_call.1} parent=51 // pred_check
        %p1174 = pneg %p157
      $region58: #{tpu_custom_call.1} parent=51 // pred_check_branch
        %1176 = sbr.rel (%p1174) target = $region60
      $region59: #{tpu_custom_call.1} parent=51 // pred_region
        %s1177 = smul.u32 32, %s19
        %p1178 = scmp.lt.s32.totalorder %s1177, 127
        %s1179 = scalar_select %p1178, %s1177, 127
        %s1180 = smul.addr %s1179, 8
        %s1181 = scalar_lea.vmem %s5, %s1180
      $region60: #{tpu_custom_call.1} parent=51 // pred_fallthru
        _
      // Predicated region
      $region61: #{tpu_custom_call.1} parent=51 // pred_check
        %p1182 = pneg %p183
      $region62: #{tpu_custom_call.1} parent=51 // pred_check_branch
        %1184 = sbr.rel (%p1182) target = $region64
      $region63: #{tpu_custom_call.1} parent=51 // pred_region
        %s1185 = smul.u32 32, %s19
        %p1186 = scmp.lt.s32.totalorder %s1185, 127
        %s1187 = scalar_select %p1186, %s1185, 127
        %s1188 = smul.addr %s1187, 8
        %s1189 = scalar_lea.vmem %s6, %s1188
      $region64: #{tpu_custom_call.1} parent=51 // pred_fallthru
        _
    $region52: #{tpu_custom_call.1} parent=5 // pred_fallthru
      _
  $region6: #{tpu_custom_call.1} parent=0 // loop_footer
    %s17 = sadd.s32 1, %s13
  $region7: #{tpu_custom_call.1} parent=0 // loop_footer_branch
    %12 = sbr.rel target = $region3
  $region8: #{tpu_custom_call.1} parent=0 // loop_exit
    _

</llo_original>
